<compile_context>
chip_gen: v6e
topology: v6e:2x2x1
jax: 0.10.0
libtpu: 0.0.40
codegen_flags: <defaults>
</compile_context>

<pallas_src>
import math

import jax
import jax.numpy as jnp
from jax.experimental import pallas as pl
from jax.experimental.pallas import tpu as pltpu

LANE = 128


def _round_up(x, m):
    return ((x + m - 1) // m) * m


# ----------------------------------------------------------------------------
# Kernel: fused MLP  (Linear -> ReLU)* -> Linear -> Sigmoid, one batch tile.
# Ref order: (z, [c], w0_z, [w0_c], b0, w1, b1, ..., out)
# ----------------------------------------------------------------------------
def _make_decoder_kernel(num_layers, conditional, num_labels):
    def kernel(*refs):
        pos = 0
        z_ref = refs[pos]; pos += 1
        c_ref = None
        if conditional:
            c_ref = refs[pos]; pos += 1
        w0z_ref = refs[pos]; pos += 1
        w0c_ref = None
        if conditional:
            w0c_ref = refs[pos]; pos += 1
        b0_ref = refs[pos]; pos += 1
        rest = refs[pos:-1]
        out_ref = refs[-1]

        # ---- layer 0: z @ W0_z (+ one-hot(c) @ W0_c) + b0 ----
        x = jnp.dot(z_ref[...].astype(jnp.bfloat16), w0z_ref[...],
                    preferred_element_type=jnp.float32)
        if conditional:
            lab = c_ref[...]                      # (TILE_B, 1) int32
            w0c = w0c_ref[...]                    # (num_labels_pad, P0) f32
            # one-hot(c) @ W0_c  ==  per-row select of W0_c rows (exact).
            for l in range(num_labels):
                sel = (lab == l).astype(jnp.float32)          # (TILE_B, 1)
                x = x + sel * w0c[l:l + 1, :]
        x = x + b0_ref[...]
        x = jnp.maximum(x, 0.0) if num_layers > 1 else jax.nn.sigmoid(x)

        # ---- remaining layers ----
        for li in range(1, num_layers):
            w_ref = rest[2 * (li - 1)]
            b_ref = rest[2 * (li - 1) + 1]
            x = jnp.dot(x.astype(jnp.bfloat16), w_ref[...],
                        preferred_element_type=jnp.float32) + b_ref[...]
            x = jnp.maximum(x, 0.0) if li + 1 < num_layers else jax.nn.sigmoid(x)

        out_ref[...] = x.astype(out_ref.dtype)

    return kernel


# ----------------------------------------------------------------------------
# Decoder module (parameters built deterministically, PyTorch-style init)
# ----------------------------------------------------------------------------
class Decoder:
    def __init__(self, layer_sizes, latent_size, conditional, num_labels, key,
                 tile_b=256):
        self.layer_sizes = list(layer_sizes)
        self.latent_size = latent_size
        self.conditional = bool(conditional)
        self.num_labels = num_labels
        self.tile_b = tile_b

        input_size = latent_size + num_labels if self.conditional else latent_size

        # --- raw f32 parameters (torch.nn.Linear default U(-1/sqrt(fan_in), ..)) ---
        self.params = []  # list of (W (in,out), b (out,)) in float32
        in_sizes = [input_size] + self.layer_sizes[:-1]
        for in_size, out_size in zip(in_sizes, self.layer_sizes):
            key, kw, kb = jax.random.split(key, 3)
            bound = 1.0 / math.sqrt(in_size)
            w = jax.random.uniform(kw, (in_size, out_size), jnp.float32, -bound, bound)
            b = jax.random.uniform(kb, (out_size,), jnp.float32, -bound, bound)
            self.params.append((w, b))

        # --- kernel-ready params: 128-padded feature dims, bf16 matmul weights,
        #     layer-0 weight split into latent part and condition (one-hot) part ---
        self.padded_sizes = [_round_up(s, LANE) for s in self.layer_sizes]

        w0, b0 = self.params[0]
        p0 = self.padded_sizes[0]
        w0p = jnp.zeros((input_size, p0), jnp.float32).at[:, : self.layer_sizes[0]].set(w0)
        if self.conditional:
            self.w0z = w0p[:latent_size, :].astype(jnp.bfloat16)
            nl_pad = _round_up(num_labels, 8)
            self.w0c = (jnp.zeros((nl_pad, p0), jnp.float32)
                        .at[:num_labels, :].set(w0p[latent_size:, :]))
        else:
            self.w0z = w0p.astype(jnp.bfloat16)
            self.w0c = None
        self.b0 = jnp.zeros((1, p0), jnp.float32).at[:, : self.layer_sizes[0]].set(b0)

        self.rest = []
        for i in range(1, len(self.layer_sizes)):
            w, b = self.params[i]
            pin, pout = self.padded_sizes[i - 1], self.padded_sizes[i]
            wp = (jnp.zeros((pin, pout), jnp.float32)
                  .at[: self.layer_sizes[i - 1], : self.layer_sizes[i]].set(w)
                  .astype(jnp.bfloat16))
            bp = jnp.zeros((1, pout), jnp.float32).at[:, : self.layer_sizes[i]].set(b)
            self.rest.append((wp, bp))

    def __call__(self, z, c=None):
        batch = z.shape[0]
        tile_b = min(self.tile_b, _round_up(batch, 8))
        batch_pad = _round_up(batch, tile_b)
        grid = (batch_pad // tile_b,)
        p_out = self.padded_sizes[-1]

        z_in = z.astype(jnp.float32)
        if batch_pad != batch:
            z_in = jnp.pad(z_in, ((0, batch_pad - batch), (0, 0)))

        inputs = [z_in]
        in_specs = [pl.BlockSpec((tile_b, self.latent_size), lambda i: (i, 0))]

        if self.conditional:
            # TODO(synk): torch idx2onehot asserts max(idx) < num_labels at runtime;
            # labels are trusted here (no in-kernel assertion).
            c_arr = jnp.asarray(c, dtype=jnp.int32)
            if c_arr.ndim == 1:
                c_arr = c_arr[:, None]
            if batch_pad != batch:
                c_arr = jnp.pad(c_arr, ((0, batch_pad - batch), (0, 0)))
            inputs.append(c_arr)
            in_specs.append(pl.BlockSpec((tile_b, 1), lambda i: (i, 0)))

        def resident(arr):  # full-array block, constant index -> stays in VMEM
            return pl.BlockSpec(arr.shape, lambda i: (0, 0))

        inputs.append(self.w0z); in_specs.append(resident(self.w0z))
        if self.conditional:
            inputs.append(self.w0c); in_specs.append(resident(self.w0c))
        inputs.append(self.b0); in_specs.append(resident(self.b0))
        for wp, bp in self.rest:
            inputs.append(wp); in_specs.append(resident(wp))
            inputs.append(bp); in_specs.append(resident(bp))

        kernel = _make_decoder_kernel(len(self.layer_sizes), self.conditional,
                                      self.num_labels)

        # VMEM budget: resident params + double-buffered activation/io tiles.
        param_start = 2 if self.conditional else 1
        param_bytes = sum(int(a.size) * a.dtype.itemsize for a in inputs[param_start:])
        io_bytes = 2 * tile_b * (self.latent_size + 1) * 4 + 2 * tile_b * p_out * 4
        act_bytes = 4 * tile_b * max(self.padded_sizes) * 4
        vmem_limit = int(min(64 << 20,
                             max(16 << 20, 2 * (param_bytes + io_bytes + act_bytes))))

        out = pl.pallas_call(
            kernel,
            grid=grid,
            out_shape=jax.ShapeDtypeStruct((batch_pad, p_out), jnp.float32),
            in_specs=in_specs,
            out_specs=pl.BlockSpec((tile_b, p_out), lambda i: (i, 0)),
            compiler_params=pltpu.CompilerParams(
                dimension_semantics=("parallel",),
                vmem_limit_bytes=vmem_limit),
        )(*inputs)

        return out[:batch, : self.layer_sizes[-1]]


# ----------------------------------------------------------------------------
# Pure-JAX (f32) reference matching the PyTorch module
# ----------------------------------------------------------------------------
def _reference_forward(dec, z, c):
    x = z.astype(jnp.float32)
    if dec.conditional:
        idx = jnp.asarray(c)
        if idx.ndim == 2 and idx.shape[1] == 1:
            idx = idx[:, 0]
        c_oh = jax.nn.one_hot(idx, dec.num_labels, dtype=jnp.float32)
        x = jnp.concatenate([x, c_oh], axis=-1)
    for i, (w, b) in enumerate(dec.params):
        x = x @ w + b
        if i + 1 < len(dec.params):
            x = jnp.maximum(x, 0.0)
        else:
            x = jax.nn.sigmoid(x)
    return x


if __name__ == "__main__":
    key = jax.random.PRNGKey(0)
    k_param, k_z, k_c = jax.random.split(key, 3)

    # Small CVAE-decoder configuration.
    latent_size = 8
    num_labels = 4
    layer_sizes = [32, 64]   # hidden -> output
    batch = 32               # small, but exercises the batch grid (tile_b=8 -> 4 steps)

    dec = Decoder(layer_sizes, latent_size, conditional=True,
                  num_labels=num_labels, key=k_param, tile_b=8)

    z = jax.random.normal(k_z, (batch, latent_size), dtype=jnp.float32)
    c = jax.random.randint(k_c, (batch,), 0, num_labels, dtype=jnp.int32)

    out = jax.block_until_ready(dec(z, c))
    ref = _reference_forward(dec, z, c)

    assert out.shape == (batch, layer_sizes[-1])
    assert bool(jnp.all(jnp.isfinite(out)))
    # bf16 MXU inputs (f32 accumulation) => slightly looser tolerance vs f32 ref.
    assert jnp.allclose(out, ref, atol=2e-2, rtol=2e-2), \
        float(jnp.max(jnp.abs(out - ref)))

    print("KERNEL_OK")
</pallas_src>

<mosaic_0001>
module attributes {stable_mosaic.version = 11 : i64} {
  func.func @kernel(%arg0: i32, %arg1: memref<8x8xf32, #tpu.memory_space<vmem>>, %arg2: memref<8x1xi32, #tpu.memory_space<vmem>>, %arg3: memref<8x128xbf16, #tpu.memory_space<vmem>>, %arg4: memref<8x128xf32, #tpu.memory_space<vmem>>, %arg5: memref<1x128xf32, #tpu.memory_space<vmem>>, %arg6: memref<128x128xbf16, #tpu.memory_space<vmem>>, %arg7: memref<1x128xf32, #tpu.memory_space<vmem>>, %arg8: memref<8x128xf32, #tpu.memory_space<vmem>>) attributes {dimension_semantics = [#tpu.dimension_semantics<parallel>], iteration_bounds = array<i64: 4>, scalar_prefetch = 0 : i64, scratch_operands = 0 : i64, tpu.core_type = #tpu.core_type<tc>, window_params = [{transform_indices = @transform_0, window_bounds = array<i64: 8, 8>}, {transform_indices = @transform_1, window_bounds = array<i64: 8, 1>}, {pipeline_mode = #tpu.pipeline_mode<synchronous>, transform_indices = @transform_2, window_bounds = array<i64: 8, 128>}, {pipeline_mode = #tpu.pipeline_mode<synchronous>, transform_indices = @transform_3, window_bounds = array<i64: 8, 128>}, {pipeline_mode = #tpu.pipeline_mode<synchronous>, transform_indices = @transform_4, window_bounds = array<i64: 1, 128>}, {pipeline_mode = #tpu.pipeline_mode<synchronous>, transform_indices = @transform_5, window_bounds = array<i64: 128, 128>}, {pipeline_mode = #tpu.pipeline_mode<synchronous>, transform_indices = @transform_6, window_bounds = array<i64: 1, 128>}, {transform_indices = @transform_7, window_bounds = array<i64: 8, 128>}]} {
    %c0 = arith.constant 0 : index
    %c0_0 = arith.constant 0 : index
    %0 = vector.load %arg1[%c0, %c0_0] : memref<8x8xf32, #tpu.memory_space<vmem>>, vector<8x8xf32>
    %1 = arith.truncf %0 : vector<8x8xf32> to vector<8x8xbf16>
    %c0_1 = arith.constant 0 : index
    %c0_2 = arith.constant 0 : index
    %2 = vector.load %arg3[%c0_1, %c0_2] : memref<8x128xbf16, #tpu.memory_space<vmem>>, vector<8x128xbf16>
    %cst = arith.constant dense<0.000000e+00> : vector<8x128xf32>
    %3 = tpu.matmul %1, %2, %cst {dimension_numbers = #tpu.dot_dimension_numbers<[1], [0], [0], [1], [0, 0, 1, 1], [], []>} : vector<8x8xbf16>, vector<8x128xbf16>, vector<8x128xf32> -> vector<8x128xf32>
    %c0_3 = arith.constant 0 : index
    %c0_4 = arith.constant 0 : index
    %4 = vector.load %arg2[%c0_3, %c0_4] : memref<8x1xi32, #tpu.memory_space<vmem>>, vector<8x1xi32>
    %c0_5 = arith.constant 0 : index
    %c0_6 = arith.constant 0 : index
    %5 = vector.load %arg4[%c0_5, %c0_6] : memref<8x128xf32, #tpu.memory_space<vmem>>, vector<8x128xf32>
    %c0_i32 = arith.constant 0 : i32
    %6 = vector.broadcast %c0_i32 : i32 to vector<8x1xi32>
    %7 = arith.cmpi eq, %4, %6 : vector<8x1xi32>
    %8 = arith.extui %7 : vector<8x1xi1> to vector<8x1xi32>
    %9 = arith.sitofp %8 : vector<8x1xi32> to vector<8x1xf32>
    %10 = vector.extract_strided_slice %5 {offsets = [0, 0], sizes = [1, 128], strides = [1, 1]} : vector<8x128xf32> to vector<1x128xf32>
    %11 = vector.broadcast %9 : vector<8x1xf32> to vector<8x128xf32>
    %12 = vector.broadcast %10 : vector<1x128xf32> to vector<8x128xf32>
    %13 = arith.mulf %11, %12 : vector<8x128xf32>
    %14 = arith.addf %3, %13 : vector<8x128xf32>
    %c1_i32 = arith.constant 1 : i32
    %15 = vector.broadcast %c1_i32 : i32 to vector<8x1xi32>
    %16 = arith.cmpi eq, %4, %15 : vector<8x1xi32>
    %17 = arith.extui %16 : vector<8x1xi1> to vector<8x1xi32>
    %18 = arith.sitofp %17 : vector<8x1xi32> to vector<8x1xf32>
    %19 = vector.extract_strided_slice %5 {offsets = [1, 0], sizes = [1, 128], strides = [1, 1]} : vector<8x128xf32> to vector<1x128xf32>
    %20 = vector.broadcast %18 : vector<8x1xf32> to vector<8x128xf32>
    %21 = vector.broadcast %19 : vector<1x128xf32> to vector<8x128xf32>
    %22 = arith.mulf %20, %21 : vector<8x128xf32>
    %23 = arith.addf %14, %22 : vector<8x128xf32>
    %c2_i32 = arith.constant 2 : i32
    %24 = vector.broadcast %c2_i32 : i32 to vector<8x1xi32>
    %25 = arith.cmpi eq, %4, %24 : vector<8x1xi32>
    %26 = arith.extui %25 : vector<8x1xi1> to vector<8x1xi32>
    %27 = arith.sitofp %26 : vector<8x1xi32> to vector<8x1xf32>
    %28 = vector.extract_strided_slice %5 {offsets = [2, 0], sizes = [1, 128], strides = [1, 1]} : vector<8x128xf32> to vector<1x128xf32>
    %29 = vector.broadcast %27 : vector<8x1xf32> to vector<8x128xf32>
    %30 = vector.broadcast %28 : vector<1x128xf32> to vector<8x128xf32>
    %31 = arith.mulf %29, %30 : vector<8x128xf32>
    %32 = arith.addf %23, %31 : vector<8x128xf32>
    %c3_i32 = arith.constant 3 : i32
    %33 = vector.broadcast %c3_i32 : i32 to vector<8x1xi32>
    %34 = arith.cmpi eq, %4, %33 : vector<8x1xi32>
    %35 = arith.extui %34 : vector<8x1xi1> to vector<8x1xi32>
    %36 = arith.sitofp %35 : vector<8x1xi32> to vector<8x1xf32>
    %37 = vector.extract_strided_slice %5 {offsets = [3, 0], sizes = [1, 128], strides = [1, 1]} : vector<8x128xf32> to vector<1x128xf32>
    %38 = vector.broadcast %36 : vector<8x1xf32> to vector<8x128xf32>
    %39 = vector.broadcast %37 : vector<1x128xf32> to vector<8x128xf32>
    %40 = arith.mulf %38, %39 : vector<8x128xf32>
    %41 = arith.addf %32, %40 : vector<8x128xf32>
    %c0_7 = arith.constant 0 : index
    %c0_8 = arith.constant 0 : index
    %42 = vector.load %arg5[%c0_7, %c0_8] : memref<1x128xf32, #tpu.memory_space<vmem>>, vector<1x128xf32>
    %43 = vector.broadcast %42 : vector<1x128xf32> to vector<8x128xf32>
    %44 = arith.addf %41, %43 : vector<8x128xf32>
    %cst_9 = arith.constant 0.000000e+00 : f32
    %45 = vector.broadcast %cst_9 : f32 to vector<8x128xf32>
    %46 = arith.maximumf %44, %45 : vector<8x128xf32>
    %47 = arith.truncf %46 : vector<8x128xf32> to vector<8x128xbf16>
    %c0_10 = arith.constant 0 : index
    %c0_11 = arith.constant 0 : index
    %48 = vector.load %arg6[%c0_10, %c0_11] : memref<128x128xbf16, #tpu.memory_space<vmem>>, vector<128x128xbf16>
    %cst_12 = arith.constant dense<0.000000e+00> : vector<8x128xf32>
    %49 = tpu.matmul %47, %48, %cst_12 {dimension_numbers = #tpu.dot_dimension_numbers<[1], [0], [0], [1], [0, 0, 1, 1], [], []>} : vector<8x128xbf16>, vector<128x128xbf16>, vector<8x128xf32> -> vector<8x128xf32>
    %c0_13 = arith.constant 0 : index
    %c0_14 = arith.constant 0 : index
    %50 = vector.load %arg7[%c0_13, %c0_14] : memref<1x128xf32, #tpu.memory_space<vmem>>, vector<1x128xf32>
    %51 = vector.broadcast %50 : vector<1x128xf32> to vector<8x128xf32>
    %52 = arith.addf %49, %51 : vector<8x128xf32>
    %53 = arith.negf %52 : vector<8x128xf32>
    %54 = math.exp %53 : vector<8x128xf32>
    %cst_15 = arith.constant 1.000000e+00 : f32
    %55 = vector.broadcast %cst_15 : f32 to vector<8x128xf32>
    %56 = arith.addf %55, %54 : vector<8x128xf32>
    %57 = arith.divf %55, %56 : vector<8x128xf32>
    %c0_16 = arith.constant 0 : index
    %c0_17 = arith.constant 0 : index
    %58 = vector.load %arg8[%c0_16, %c0_17] : memref<8x128xf32, #tpu.memory_space<vmem>>, vector<8x128xf32>
    tpu.vector_store %arg8[%c0_16, %c0_17], %57 {strides = array<i32>} : memref<8x128xf32, #tpu.memory_space<vmem>>, vector<8x128xf32>,
    return
  }
  func.func @transform_0(%arg0: i32) -> (i32, i32) {
    %c0_i32 = arith.constant 0 : i32
    %c0_i32_0 = arith.constant 0 : i32
    return %arg0, %c0_i32 : i32, i32
  }
  func.func @transform_1(%arg0: i32) -> (i32, i32) {
    %c0_i32 = arith.constant 0 : i32
    %c0_i32_0 = arith.constant 0 : i32
    return %arg0, %c0_i32 : i32, i32
  }
  func.func @transform_2(%arg0: i32) -> (i32, i32) {
    %c0_i32 = arith.constant 0 : i32
    %c0_i32_0 = arith.constant 0 : i32
    %c0_i32_1 = arith.constant 0 : i32
    return %c0_i32, %c0_i32_0 : i32, i32
  }
  func.func @transform_3(%arg0: i32) -> (i32, i32) {
    %c0_i32 = arith.constant 0 : i32
    %c0_i32_0 = arith.constant 0 : i32
    %c0_i32_1 = arith.constant 0 : i32
    return %c0_i32, %c0_i32_0 : i32, i32
  }
  func.func @transform_4(%arg0: i32) -> (i32, i32) {
    %c0_i32 = arith.constant 0 : i32
    %c0_i32_0 = arith.constant 0 : i32
    %c0_i32_1 = arith.constant 0 : i32
    return %c0_i32, %c0_i32_0 : i32, i32
  }
  func.func @transform_5(%arg0: i32) -> (i32, i32) {
    %c0_i32 = arith.constant 0 : i32
    %c0_i32_0 = arith.constant 0 : i32
    %c0_i32_1 = arith.constant 0 : i32
    return %c0_i32, %c0_i32_0 : i32, i32
  }
  func.func @transform_6(%arg0: i32) -> (i32, i32) {
    %c0_i32 = arith.constant 0 : i32
    %c0_i32_0 = arith.constant 0 : i32
    %c0_i32_1 = arith.constant 0 : i32
    return %c0_i32, %c0_i32_0 : i32, i32
  }
  func.func @transform_7(%arg0: i32) -> (i32, i32) {
    %c0_i32 = arith.constant 0 : i32
    %c0_i32_0 = arith.constant 0 : i32
    return %arg0, %c0_i32 : i32, i32
  }
}

</mosaic_0001>

<llo_original>
// kernel: tpu_custom_call.1
$region0: #{tpu_custom_call.1}
  #allocation0 [shape = 'u32[]', space=smem, size = 0x4, offset = 0x4, fixed_abs, tag = 'smem constant byte address 0x4 - core index']
  #allocation1 [shape = 'u32[144,128]{1,0:T(1,128)}', space=vmem, size = 0x12000, scoped, tag = 'internal scratch']
  %s0 = inlined_call_operand.vmem [shape: f32[32,8], index: 0, kind: input, shape index: {}]
  %s1 = inlined_call_operand.vmem [shape: s32[32,1], index: 1, kind: input, shape index: {}]
  %s2 = inlined_call_operand.vmem [shape: bf16[8,128], index: 2, kind: input, shape index: {}]
  %s3 = inlined_call_operand.vmem [shape: f32[8,128], index: 3, kind: input, shape index: {}]
  %s4 = inlined_call_operand.vmem [shape: f32[1,128], index: 4, kind: input, shape index: {}]
  %s5 = inlined_call_operand.vmem [shape: bf16[128,128], index: 5, kind: input, shape index: {}]
  %s6 = inlined_call_operand.vmem [shape: f32[1,128], index: 6, kind: input, shape index: {}]
  %s7 = inlined_call_operand.hbm [shape: f32[32,128], index: 7, kind: output, shape index: {}]
  %s8 = sld [smem:[#allocation0]]
  $region61: #{tpu_custom_call.1} parent=0
    _
  %s10 = ssub.s32 1, %s8
  %s11 = scalar_select 0, %s10, %s8
  $region1: #{tpu_custom_call.1} parent=0
    #allocation2 [shape = 'u8[8192]{0}', space=vmem, size = 0x2000, scoped, tag = 'output window, operand 0']
    #allocation3 [shape = 's32[2]{0}', space=sflag, size = 0x8, scoped, tag = 'scoped memory for tpu_custom_call.1']
    %12 = vsyncpa [#allocation3], 0
    %s13 = scalar_lea.sflag [#allocation3], 1
    %14 = vsyncpa %s13, 0
    loop: start=0, step=1, limit=6
    $region2: #{tpu_custom_call.1} parent=1 // loop_pre_header
      _
    $region3: #{tpu_custom_call.1} parent=1 // loop_header
      %s16 = sphi 0, %s20
      %p17 = scmp.ge.s32.totalorder %s16, 6
      %s26 = sphi 0, %s28
      %s29 = sphi 0, %s26
      %s30 = sphi 0, %s29
      %s46 = sphi 0, %s30
      %s52 = sphi 0, %s54
      %s55 = sphi 0, %s52
      %s56 = sphi 0, %s55
      %s72 = sphi 0, %s56
      %s76 = sphi 0, %s76
      %s78 = sphi 0, %s76
      %s79 = sphi 0, %s78
      %s93 = sphi 0, %s79
      %s97 = sphi 0, %s97
      %s99 = sphi 0, %s97
      %s100 = sphi 0, %s99
      %s114 = sphi 0, %s100
      %s118 = sphi 0, %s118
      %s120 = sphi 0, %s118
      %s121 = sphi 0, %s120
      %s135 = sphi 0, %s121
      %s139 = sphi 0, %s139
      %s141 = sphi 0, %s139
      %s142 = sphi 0, %s141
      %s156 = sphi 0, %s142
      %s160 = sphi 0, %s160
      %s162 = sphi 0, %s160
      %s163 = sphi 0, %s162
      %s177 = sphi 0, %s163
      %s183 = sphi 0, %s185
      %s186 = sphi 0, %s183
      %s187 = sphi 0, %s186
      %s203 = sphi 0, %s187
    $region4: #{tpu_custom_call.1} parent=1 // loop_header_branch
      %19 = sbr.rel (%p17) target = $region8
    $region5: #{tpu_custom_call.1} parent=1 // loop_body
      %s21 = ssub.s32 %s16, 1
      %s22 = ssub.s32 %s16, 2
      %s23 = sadd.s32 %s16, 1
      %s24 = ssub.s32 %s16, %s23
      %p25 = scmp.eq.s32.totalorder %s24, 0
      %s27 = sadd.s32 %s26, 1
      %s28 = scalar_select %p25, %s26, %s27
      %p31 = pneg %p25
      %p32 = scmp.eq.s32.totalorder %s16, 3
      %p33 = por %p31, %p32
      %p34 = scmp.ne.s32.totalorder %s26, %s29
      %p35 = scmp.eq.s32.totalorder %s16, 0
      %p36 = por %p34, %p35
      %p37 = scmp.ne.s32.totalorder %s26, %s29
      %p38 = scmp.eq.s32.totalorder %s21, 3
      %p39 = por %p37, %p38
      %p40 = scmp.ne.s32.totalorder %s29, %s30
      %p41 = scmp.eq.s32.totalorder %s21, 0
      %p42 = por %p40, %p41
      %p43 = scmp.ne.s32.totalorder %s29, %s30
      %p44 = scmp.eq.s32.totalorder %s22, 3
      %p45 = por %p43, %p44
      %p47 = scmp.ne.s32.totalorder %s30, %s46
      %p48 = scmp.eq.s32.totalorder %s22, 0
      %p49 = por %p47, %p48
      %s50 = ssub.s32 %s16, %s23
      %p51 = scmp.eq.s32.totalorder %s50, 0
      %s53 = sadd.s32 %s52, 1
      %s54 = scalar_select %p51, %s52, %s53
      %p57 = pneg %p51
      %p58 = scmp.eq.s32.totalorder %s16, 3
      %p59 = por %p57, %p58
      %p60 = scmp.ne.s32.totalorder %s52, %s55
      %p61 = scmp.eq.s32.totalorder %s16, 0
      %p62 = por %p60, %p61
      %p63 = scmp.ne.s32.totalorder %s52, %s55
      %p64 = scmp.eq.s32.totalorder %s21, 3
      %p65 = por %p63, %p64
      %p66 = scmp.ne.s32.totalorder %s55, %s56
      %p67 = scmp.eq.s32.totalorder %s21, 0
      %p68 = por %p66, %p67
      %p69 = scmp.ne.s32.totalorder %s55, %s56
      %p70 = scmp.eq.s32.totalorder %s22, 3
      %p71 = por %p69, %p70
      %p73 = scmp.ne.s32.totalorder %s56, %s72
      %p74 = scmp.eq.s32.totalorder %s22, 0
      %p75 = por %p73, %p74
      %s77 = sadd.s32 %s76, 1
      %p80 = scmp.eq.s32.totalorder %s16, 3
      %p81 = scmp.ne.s32.totalorder %s76, %s78
      %p82 = scmp.eq.s32.totalorder %s16, 0
      %p83 = por %p81, %p82
      %p84 = scmp.ne.s32.totalorder %s76, %s78
      %p85 = scmp.eq.s32.totalorder %s21, 3
      %p86 = por %p84, %p85
      %p87 = scmp.ne.s32.totalorder %s78, %s79
      %p88 = scmp.eq.s32.totalorder %s21, 0
      %p89 = por %p87, %p88
      %p90 = scmp.ne.s32.totalorder %s78, %s79
      %p91 = scmp.eq.s32.totalorder %s22, 3
      %p92 = por %p90, %p91
      %p94 = scmp.ne.s32.totalorder %s79, %s93
      %p95 = scmp.eq.s32.totalorder %s22, 0
      %p96 = por %p94, %p95
      %s98 = sadd.s32 %s97, 1
      %p101 = scmp.eq.s32.totalorder %s16, 3
      %p102 = scmp.ne.s32.totalorder %s97, %s99
      %p103 = scmp.eq.s32.totalorder %s16, 0
      %p104 = por %p102, %p103
      %p105 = scmp.ne.s32.totalorder %s97, %s99
      %p106 = scmp.eq.s32.totalorder %s21, 3
      %p107 = por %p105, %p106
      %p108 = scmp.ne.s32.totalorder %s99, %s100
      %p109 = scmp.eq.s32.totalorder %s21, 0
      %p110 = por %p108, %p109
      %p111 = scmp.ne.s32.totalorder %s99, %s100
      %p112 = scmp.eq.s32.totalorder %s22, 3
      %p113 = por %p111, %p112
      %p115 = scmp.ne.s32.totalorder %s100, %s114
      %p116 = scmp.eq.s32.totalorder %s22, 0
      %p117 = por %p115, %p116
      %s119 = sadd.s32 %s118, 1
      %p122 = scmp.eq.s32.totalorder %s16, 3
      %p123 = scmp.ne.s32.totalorder %s118, %s120
      %p124 = scmp.eq.s32.totalorder %s16, 0
      %p125 = por %p123, %p124
      %p126 = scmp.ne.s32.totalorder %s118, %s120
      %p127 = scmp.eq.s32.totalorder %s21, 3
      %p128 = por %p126, %p127
      %p129 = scmp.ne.s32.totalorder %s120, %s121
      %p130 = scmp.eq.s32.totalorder %s21, 0
      %p131 = por %p129, %p130
      %p132 = scmp.ne.s32.totalorder %s120, %s121
      %p133 = scmp.eq.s32.totalorder %s22, 3
      %p134 = por %p132, %p133
      %p136 = scmp.ne.s32.totalorder %s121, %s135
      %p137 = scmp.eq.s32.totalorder %s22, 0
      %p138 = por %p136, %p137
      %s140 = sadd.s32 %s139, 1
      %p143 = scmp.eq.s32.totalorder %s16, 3
      %p144 = scmp.ne.s32.totalorder %s139, %s141
      %p145 = scmp.eq.s32.totalorder %s16, 0
      %p146 = por %p144, %p145
      %p147 = scmp.ne.s32.totalorder %s139, %s141
      %p148 = scmp.eq.s32.totalorder %s21, 3
      %p149 = por %p147, %p148
      %p150 = scmp.ne.s32.totalorder %s141, %s142
      %p151 = scmp.eq.s32.totalorder %s21, 0
      %p152 = por %p150, %p151
      %p153 = scmp.ne.s32.totalorder %s141, %s142
      %p154 = scmp.eq.s32.totalorder %s22, 3
      %p155 = por %p153, %p154
      %p157 = scmp.ne.s32.totalorder %s142, %s156
      %p158 = scmp.eq.s32.totalorder %s22, 0
      %p159 = por %p157, %p158
      %s161 = sadd.s32 %s160, 1
      %p164 = scmp.eq.s32.totalorder %s16, 3
      %p165 = scmp.ne.s32.totalorder %s160, %s162
      %p166 = scmp.eq.s32.totalorder %s16, 0
      %p167 = por %p165, %p166
      %p168 = scmp.ne.s32.totalorder %s160, %s162
      %p169 = scmp.eq.s32.totalorder %s21, 3
      %p170 = por %p168, %p169
      %p171 = scmp.ne.s32.totalorder %s162, %s163
      %p172 = scmp.eq.s32.totalorder %s21, 0
      %p173 = por %p171, %p172
      %p174 = scmp.ne.s32.totalorder %s162, %s163
      %p175 = scmp.eq.s32.totalorder %s22, 3
      %p176 = por %p174, %p175
      %p178 = scmp.ne.s32.totalorder %s163, %s177
      %p179 = scmp.eq.s32.totalorder %s22, 0
      %p180 = por %p178, %p179
      %s181 = ssub.s32 %s16, %s23
      %p182 = scmp.eq.s32.totalorder %s181, 0
      %s184 = sadd.s32 %s183, 1
      %s185 = scalar_select %p182, %s183, %s184
      %p188 = pneg %p182
      %p189 = scmp.eq.s32.totalorder %s16, 3
      %p190 = por %p188, %p189
      %p191 = scmp.ne.s32.totalorder %s183, %s186
      %p192 = scmp.eq.s32.totalorder %s16, 0
      %p193 = por %p191, %p192
      %p194 = scmp.ne.s32.totalorder %s183, %s186
      %p195 = scmp.eq.s32.totalorder %s21, 3
      %p196 = por %p194, %p195
      %p197 = scmp.ne.s32.totalorder %s186, %s187
      %p198 = scmp.eq.s32.totalorder %s21, 0
      %p199 = por %p197, %p198
      %p200 = scmp.ne.s32.totalorder %s186, %s187
      %p201 = scmp.eq.s32.totalorder %s22, 3
      %p202 = por %p200, %p201
      %p204 = scmp.ne.s32.totalorder %s187, %s203
      %p205 = scmp.eq.s32.totalorder %s22, 0
      %p206 = por %p204, %p205
      %p207 = scmp.le.s32.totalorder 1, %s16
      %p208 = scmp.lt.s32.totalorder %s16, 5
      %p209 = pnand %p207, %p208
      %p210 = pneg %p209
      // Predicated region
      $region9: #{tpu_custom_call.1} parent=5 // pred_check
        _
      $region10: #{tpu_custom_call.1} parent=5 // pred_check_branch
        %212 = sbr.rel (%p209) target = $region12
      $region11: #{tpu_custom_call.1} parent=5 // pred_region
        %s213 = ssub.s32 %s16, 1
        // Predicated region
        $region13: #{tpu_custom_call.1} parent=11 // pred_check
          %p214 = pneg %p89
        $region14: #{tpu_custom_call.1} parent=11 // pred_check_branch
          %216 = sbr.rel (%p214) target = $region16
        $region15: #{tpu_custom_call.1} parent=11 // pred_region
          _
        $region16: #{tpu_custom_call.1} parent=11 // pred_fallthru
          _
        // Predicated region
        $region17: #{tpu_custom_call.1} parent=11 // pred_check
          %p217 = pneg %p110
        $region18: #{tpu_custom_call.1} parent=11 // pred_check_branch
          %219 = sbr.rel (%p217) target = $region20
        $region19: #{tpu_custom_call.1} parent=11 // pred_region
          _
        $region20: #{tpu_custom_call.1} parent=11 // pred_fallthru
          _
        // Predicated region
        $region21: #{tpu_custom_call.1} parent=11 // pred_check
          %p220 = pneg %p131
        $region22: #{tpu_custom_call.1} parent=11 // pred_check_branch
          %222 = sbr.rel (%p220) target = $region24
        $region23: #{tpu_custom_call.1} parent=11 // pred_region
          _
        $region24: #{tpu_custom_call.1} parent=11 // pred_fallthru
          _
        // Predicated region
        $region25: #{tpu_custom_call.1} parent=11 // pred_check
          %p223 = pneg %p152
        $region26: #{tpu_custom_call.1} parent=11 // pred_check_branch
          %225 = sbr.rel (%p223) target = $region28
        $region27: #{tpu_custom_call.1} parent=11 // pred_region
          _
        $region28: #{tpu_custom_call.1} parent=11 // pred_fallthru
          _
        // Predicated region
        $region29: #{tpu_custom_call.1} parent=11 // pred_check
          %p226 = pneg %p173
        $region30: #{tpu_custom_call.1} parent=11 // pred_check_branch
          %228 = sbr.rel (%p226) target = $region32
        $region31: #{tpu_custom_call.1} parent=11 // pred_region
          _
        $region32: #{tpu_custom_call.1} parent=11 // pred_fallthru
          _
      $region12: #{tpu_custom_call.1} parent=5 // pred_fallthru
        _
      %p229 = scmp.lt.s32.totalorder %s16, 4
      // Predicated region
      $region33: #{tpu_custom_call.1} parent=5 // pred_check
        %p230 = pneg %p229
      $region34: #{tpu_custom_call.1} parent=5 // pred_check_branch
        %232 = sbr.rel (%p230) target = $region36
      $region35: #{tpu_custom_call.1} parent=5 // pred_region
        // Predicated region
        $region37: #{tpu_custom_call.1} parent=35 // pred_check
          %p233 = pneg %p36
        $region38: #{tpu_custom_call.1} parent=35 // pred_check_branch
          %235 = sbr.rel (%p233) target = $region40
        $region39: #{tpu_custom_call.1} parent=35 // pred_region
          %p236 = scmp.lt.s32.totalorder %s16, 3
          %s237 = scalar_select %p236, %s16, 3
          %s238 = smul.addr %s237, 8
          %s239 = scalar_lea.vmem %s0, %s238
        $region40: #{tpu_custom_call.1} parent=35 // pred_fallthru
          _
        // Predicated region
        $region41: #{tpu_custom_call.1} parent=35 // pred_check
          %p240 = pneg %p62
        $region42: #{tpu_custom_call.1} parent=35 // pred_check_branch
          %242 = sbr.rel (%p240) target = $region44
        $region43: #{tpu_custom_call.1} parent=35 // pred_region
          %p243 = scmp.lt.s32.totalorder %s16, 3
          %s244 = scalar_select %p243, %s16, 3
          %s245 = smul.addr %s244, 8
          %s246 = scalar_lea.vmem %s1, %s245
        $region44: #{tpu_custom_call.1} parent=35 // pred_fallthru
          _
      $region36: #{tpu_custom_call.1} parent=5 // pred_fallthru
        _
      %p247 = scmp.le.s32.totalorder 1, %s16
      %p248 = scmp.lt.s32.totalorder %s16, 5
      %p249 = pnand %p247, %p248
      %p250 = pneg %p249
      // Predicated region
      $region45: #{tpu_custom_call.1} parent=5 // pred_check
        _
      $region46: #{tpu_custom_call.1} parent=5 // pred_check_branch
        %252 = sbr.rel (%p249) target = $region48
      $region47: #{tpu_custom_call.1} parent=5 // pred_region
        %s253 = ssub.s32 %s16, 1
        %p254 = scmp.lt.s32.totalorder %s21, 3
        %s255 = scalar_select %p254, %s21, 3
        %s256 = smul.addr %s255, 8
        %s257 = scalar_lea.vmem %s0, %s256
        %p258 = pneg %p42
        %p259 = pneg %p39
        %p260 = scmp.lt.s32.totalorder %s21, 3
        %s261 = scalar_select %p260, %s21, 3
        %s262 = smul.addr %s261, 8
        %s263 = scalar_lea.vmem %s1, %s262
        %p264 = pneg %p68
        %p265 = pneg %p65
        %p266 = pneg %p89
        %p267 = pneg %p86
        %p268 = pneg %p110
        %p269 = pneg %p107
        %p270 = pneg %p131
        %p271 = pneg %p128
        %p272 = pneg %p152
        %p273 = pneg %p149
        %p274 = pneg %p173
        %p275 = pneg %p170
        %p276 = pneg %p199
        %p277 = pneg %p196
        %s278 = sand.u32 %s186, 1
        %s279 = scalar_lea.sflag [#allocation3], %s278
        %s280 = sand.u32 %s186, 1
        %s281 = smul.addr %s280, 8
        %s282 = scalar_lea.vmem [#allocation2], %s281
        %p283 = scmp.lt.s32.totalorder %s21, 3
        %s284 = scalar_select %p283, %s21, 3
        %s285 = smul.addr %s284, 8
        %s286 = scalar_lea.vmem %s0, %s285
        %p287 = scmp.lt.s32.totalorder %s21, 3
        %s288 = scalar_select %p287, %s21, 3
        %s289 = smul.addr %s288, 8
        %s290 = scalar_lea.vmem %s1, %s289
        %v292 = vld [vmem:[%s286] sm:$0xff]
        %v293 = vpack.c.bf16 %v292, %v292
        %v294 = vld [vmem:[%s2] sm:$0xf]
        %v295 = vld [vmem:[%s290] sm:$0xff]
        %v296 = vld [vmem:[%s3] sm:$0xff]
        %vm297 = vcmp.eq.s32.totalorder %v295, 0
        %v298 = vsel %vm297, 1, 0
        %v299 = vcvt.s32.f32 %v298
        %301 = vset.pattern.permute.xlu0 0
        %302 = vperm.xlu0 %301, %v299
        %v303 = vpop.permute.xlu0 %302
        %v305 = vlaneseq
        %v306 = vshrl.u32 %v305, 7
        %v307 = vsub.s32 0, %v306
        %v308 = vrot.slane %v296, %v307
        %v309 = vmul.f32 %v303, %v308
        %vm310 = vcmask 64512
        %v312 = vsel %vm310, %v293, 0
        %vm314 = vcmask 1043456
        %v316 = vsel %vm314, %v294, 0
        %318 = vmatprep.subr.bf16.mxu0 0
        %319 = vmatpush1.bf16.msra.mxu0 0
        %320 = vmatprep.subr.bf16.mxu0 0
        %321 = vmatpush1.bf16.msra.mxu0 0
        %322 = vmatprep.subr.bf16.mxu0 0
        %323 = vmatpush1.bf16.msra.mxu0 0
        %324 = vmatprep.subr.bf16.mxu0 0
        %325 = vmatpush1.bf16.msra.mxu0 0
        %326 = vmatprep.subr.bf16.mxu0 0
        %327 = vmatpush1.bf16.msra.mxu0 0
        %328 = vmatprep.subr.bf16.mxu0 0
        %329 = vmatpush1.bf16.msra.mxu0 0
        %330 = vmatprep.subr.bf16.mxu0 0
        %331 = vmatpush1.bf16.msra.mxu0 0
        %332 = vmatprep.subr.bf16.mxu0 0
        %333 = vmatpush1.bf16.msra.mxu0 %v316
        %334 = vmatprep.subr.bf16.mxu0 0
        %335 = vmatpush2.bf16.msra.mxu0 0
        %336 = vmatprep.subr.bf16.mxu0 0
        %337 = vmatpush2.bf16.msra.mxu0 0
        %338 = vmatprep.subr.bf16.mxu0 0
        %339 = vmatpush2.bf16.msra.mxu0 0
        %340 = vmatprep.subr.bf16.mxu0 0
        %341 = vmatpush2.bf16.msra.mxu0 0
        %342 = vmatprep.subr.bf16.mxu0 0
        %343 = vmatpush2.bf16.msra.mxu0 0
        %344 = vmatprep.subr.bf16.mxu0 0
        %345 = vmatpush2.bf16.msra.mxu0 0
        %346 = vmatprep.subr.bf16.mxu0 0
        %347 = vmatpush2.bf16.msra.mxu0 0
        %348 = vmatprep.subr.bf16.mxu0 0
        %349 = vmatpush2.bf16.msra.mxu0 0
        %350 = vmatprep.mubr.bf16.mxu0 0
        %351 = vmatmul.mubr.bf16.gmra.mxu0 %v312
        %v352 = vpop.f32.mrf.mxu0
        %v353 = vadd.f32 %v309, %v352
        %v354 = vpop.f32.mrf.mxu0
        %v355 = vpop.f32.mrf.mxu0
        %v356 = vpop.f32.mrf.mxu0
        %357 = vdwg.mxu0
        %vm358 = vcmp.eq.s32.totalorder %v295, 1
        %v359 = vsel %vm358, 1, 0
        %v360 = vcvt.s32.f32 %v359
        %362 = vset.pattern.permute.xlu0 0
        %363 = vperm.xlu0 %362, %v360
        %v364 = vpop.permute.xlu0 %363
        %v366 = vlaneseq
        %v367 = vshrl.u32 %v366, 7
        %v368 = vsub.s32 1, %v367
        %v369 = vrot.slane %v296, %v368
        %v370 = vmul.f32 %v364, %v369
        %v371 = vadd.f32 %v353, %v370
        %vm372 = vcmp.eq.s32.totalorder %v295, 2
        %v373 = vsel %vm372, 1, 0
        %v374 = vcvt.s32.f32 %v373
        %376 = vset.pattern.permute.xlu0 0
        %377 = vperm.xlu0 %376, %v374
        %v378 = vpop.permute.xlu0 %377
        %v380 = vlaneseq
        %v381 = vshrl.u32 %v380, 7
        %v382 = vsub.s32 2, %v381
        %v383 = vrot.slane %v296, %v382
        %v384 = vmul.f32 %v378, %v383
        %v385 = vadd.f32 %v371, %v384
        %vm386 = vcmp.eq.s32.totalorder %v295, 3
        %v387 = vsel %vm386, 1, 0
        %v388 = vcvt.s32.f32 %v387
        %390 = vset.pattern.permute.xlu0 0
        %391 = vperm.xlu0 %390, %v388
        %v392 = vpop.permute.xlu0 %391
        %v394 = vlaneseq
        %v395 = vshrl.u32 %v394, 7
        %v396 = vsub.s32 3, %v395
        %v397 = vrot.slane %v296, %v396
        %v398 = vmul.f32 %v392, %v397
        %v399 = vadd.f32 %v385, %v398
        %v400 = vld [vmem:[%s4] sm:$0x1]
        %v402 = vlaneseq
        %v403 = vshrl.u32 %v402, 7
        %v404 = vsub.s32 0, %v403
        %v405 = vrot.slane %v400, %v404
        %v407 = vadd.f32 %v399, %v405
        %v408 = vmax.f32 %v407, 0.0
        %v409 = vpack.c.bf16 %v408, %v408
        %v410 = vld [vmem:[%s5] sm:$0xf]
        %v411 = vld [vmem:[%s5 + $0x4] sm:$0xf]
        %v412 = vld [vmem:[%s5 + $0x8] sm:$0xf]
        %v413 = vld [vmem:[%s5 + $0xc] sm:$0xf]
        %v414 = vld [vmem:[%s5 + $0x10] sm:$0xf]
        %v415 = vld [vmem:[%s5 + $0x14] sm:$0xf]
        %v416 = vld [vmem:[%s5 + $0x18] sm:$0xf]
        %v417 = vld [vmem:[%s5 + $0x1c] sm:$0xf]
        %v418 = vld [vmem:[%s5 + $0x20] sm:$0xf]
        %v419 = vld [vmem:[%s5 + $0x24] sm:$0xf]
        %v420 = vld [vmem:[%s5 + $0x28] sm:$0xf]
        %v421 = vld [vmem:[%s5 + $0x2c] sm:$0xf]
        %v422 = vld [vmem:[%s5 + $0x30] sm:$0xf]
        %v423 = vld [vmem:[%s5 + $0x34] sm:$0xf]
        %v424 = vld [vmem:[%s5 + $0x38] sm:$0xf]
        %v425 = vld [vmem:[%s5 + $0x3c] sm:$0xf]
        %v426 = vld [vmem:[%s6] sm:$0x1]
        %v428 = vlaneseq
        %v429 = vshrl.u32 %v428, 7
        %v430 = vsub.s32 0, %v429
        %v431 = vrot.slane %v426, %v430
        %v449 = vunpack.c.l.b16 %v410
        %v450 = vunpack.c.l.b16 %v411
        %v451 = vunpack.c.l.b16 %v412
        %v452 = vunpack.c.l.b16 %v413
        %v453 = vunpack.c.l.b16 %v414
        %v454 = vunpack.c.l.b16 %v415
        %v455 = vunpack.c.l.b16 %v416
        %v456 = vunpack.c.l.b16 %v417
        %v457 = vunpack.c.l.b16 %v418
        %v458 = vunpack.c.l.b16 %v419
        %v459 = vunpack.c.l.b16 %v420
        %v460 = vunpack.c.l.b16 %v421
        %v461 = vunpack.c.l.b16 %v422
        %v462 = vunpack.c.l.b16 %v423
        %v463 = vunpack.c.l.b16 %v424
        %v464 = vunpack.c.l.b16 %v425
        %v465 = vpack.c.b16 %v450, %v449
        %v466 = vpack.c.b16 %v452, %v451
        %v467 = vpack.c.b16 %v454, %v453
        %v468 = vpack.c.b16 %v456, %v455
        %v469 = vpack.c.b16 %v458, %v457
        %v470 = vpack.c.b16 %v460, %v459
        %v471 = vpack.c.b16 %v462, %v461
        %v472 = vpack.c.b16 %v464, %v463
        %481 = vmatprep.subr.bf16.mxu0 0
        %482 = vmatpush1.bf16.msra.mxu0 %v472
        %483 = vmatprep.subr.bf16.mxu0 0
        %484 = vmatpush1.bf16.msra.mxu0 %v471
        %485 = vmatprep.subr.bf16.mxu0 0
        %486 = vmatpush1.bf16.msra.mxu0 %v470
        %487 = vmatprep.subr.bf16.mxu0 0
        %488 = vmatpush1.bf16.msra.mxu0 %v469
        %489 = vmatprep.subr.bf16.mxu0 0
        %490 = vmatpush1.bf16.msra.mxu0 %v468
        %491 = vmatprep.subr.bf16.mxu0 0
        %492 = vmatpush1.bf16.msra.mxu0 %v467
        %493 = vmatprep.subr.bf16.mxu0 0
        %494 = vmatpush1.bf16.msra.mxu0 %v466
        %495 = vmatprep.subr.bf16.mxu0 0
        %496 = vmatpush1.bf16.msra.mxu0 %v465
        %497 = vmatprep.subr.bf16.mxu0 0
        %498 = vmatpush2.bf16.msra.mxu0 0
        %499 = vmatprep.subr.bf16.mxu0 0
        %500 = vmatpush2.bf16.msra.mxu0 0
        %501 = vmatprep.subr.bf16.mxu0 0
        %502 = vmatpush2.bf16.msra.mxu0 0
        %503 = vmatprep.subr.bf16.mxu0 0
        %504 = vmatpush2.bf16.msra.mxu0 0
        %505 = vmatprep.subr.bf16.mxu0 0
        %506 = vmatpush2.bf16.msra.mxu0 0
        %507 = vmatprep.subr.bf16.mxu0 0
        %508 = vmatpush2.bf16.msra.mxu0 0
        %509 = vmatprep.subr.bf16.mxu0 0
        %510 = vmatpush2.bf16.msra.mxu0 0
        %511 = vmatprep.subr.bf16.mxu0 0
        %512 = vmatpush2.bf16.msra.mxu0 0
        %513 = vmatprep.mubr.bf16.mxu0 0
        %514 = vmatmul.mubr.bf16.gmra.mxu0 %v409
        %v515 = vpop.f32.mrf.mxu0
        %v516 = vadd.f32 %v431, %v515
        %v517 = vpop.f32.mrf.mxu0
        %v518 = vpop.f32.mrf.mxu0
        %v519 = vpop.f32.mrf.mxu0
        %520 = vdwg.mxu0
        %v521 = vxor.u32 %v516, 2147483648
        %v522 = vmul.f32 %v521, 1.442695
        %v523 = vpow.pop %v522
        %v524 = vadd.f32 %v523, 1.0
        %v525 = vrcp.pop %v524
        %v526 = vmul.f32 1.0, %v525
        %527 = vst [vmem:[%s282] sm:$0xff] %v526
        %s528 = sand.u32 %s186, 1
        %s529 = scalar_lea.sflag [#allocation3], %s528
        %s530 = sand.u32 %s186, 1
        %s531 = smul.addr %s530, 8
        %s532 = scalar_lea.vmem [#allocation2], %s531
        // Predicated region
        $region49: #{tpu_custom_call.1} parent=47 // pred_check
          %p533 = pneg %p196
        $region50: #{tpu_custom_call.1} parent=47 // pred_check_branch
          %535 = sbr.rel (%p533) target = $region52
        $region51: #{tpu_custom_call.1} parent=47 // pred_region
          %s537 = ssub.s32 128, 128
          %538 = vsyncadd %s529, %s537
          %s539 = smul.addr %s21, 128
          %s540 = scalar_lea.hbm %s7, %s539
          %s542 = sshll.u32 %s532, 4
          %s543 = int_to_ptr.vmem [resolvable:$true] %s542
          %545 = dma.vmem_to_hbm [thread:$0]  %s543, 128, %s540, %s529
        $region52: #{tpu_custom_call.1} parent=47 // pred_fallthru
          _
      $region48: #{tpu_custom_call.1} parent=5 // pred_fallthru
        _
      %p546 = scmp.le.s32.totalorder 2, %s16
      // Predicated region
      $region53: #{tpu_custom_call.1} parent=5 // pred_check
        %p547 = pneg %p546
      $region54: #{tpu_custom_call.1} parent=5 // pred_check_branch
        %549 = sbr.rel (%p547) target = $region56
      $region55: #{tpu_custom_call.1} parent=5 // pred_region
        %s550 = ssub.s32 %s16, 2
        // Predicated region
        $region57: #{tpu_custom_call.1} parent=55 // pred_check
          %p551 = pneg %p202
        $region58: #{tpu_custom_call.1} parent=55 // pred_check_branch
          %553 = sbr.rel (%p551) target = $region60
        $region59: #{tpu_custom_call.1} parent=55 // pred_region
          %s554 = sand.u32 %s187, 1
          %s555 = scalar_lea.sflag [#allocation3], %s554
          %s556 = sand.u32 %s187, 1
          %s557 = smul.addr %s556, 8
          %s558 = scalar_lea.vmem [#allocation2], %s557
          %559 = dma.done %s555, 128
        $region60: #{tpu_custom_call.1} parent=55 // pred_fallthru
          _
      $region56: #{tpu_custom_call.1} parent=5 // pred_fallthru
        _
    $region6: #{tpu_custom_call.1} parent=1 // loop_footer
      %s20 = sadd.s32 1, %s16
    $region7: #{tpu_custom_call.1} parent=1 // loop_footer_branch
      %15 = sbr.rel target = $region3
    $region8: #{tpu_custom_call.1} parent=1 // loop_exit
      _
    %560 = vsyncpa [#allocation3], 1
    %s561 = scalar_lea.sflag [#allocation3], 1
    %562 = vsyncpa %s561, 1

</llo_original>
